<compile_context>
chip_gen: v7x
topology: tpu7x:2x2x1
jax: 0.10.0
libtpu: 0.0.40
codegen_flags: <defaults>
</compile_context>

<pallas_src>
import functools

import jax
import jax.numpy as jnp
from jax.experimental import pallas as pl
from jax.experimental.pallas import tpu as pltpu


def _round_up(x, m):
    return (x + m - 1) // m * m


# ----------------------------- Pallas kernel --------------------------------
def _demographic_mlp_kernel(ids_ref, m_small_ref, t2_ref, w1i_ref,
                            b1_ref, w2_ref, b2_ref, o_ref,
                            *, offsets, lo_width):
    f32 = jnp.float32
    tb = o_ref.shape[1]
    e_dim = w1i_ref.shape[1]                       # embed_dim (8)
    n_hi = t2_ref.shape[0] // e_dim                # 16 hi-radix buckets
    n_small = m_small_ref.shape[1]                 # 16 (padded small vocab)
    shift = lo_width.bit_length() - 1              # log2(32) = 5

    ids = ids_ref[...]                             # (5, tb) int32, one DMA'd block
    g, a, mj, gr, it = (ids[f:f + 1, :] for f in range(5))

    row_lo = jax.lax.broadcasted_iota(jnp.int32, (lo_width, tb), 0)   # (32, tb)
    row_sm = row_lo[:n_small, :]                                      # (16, tb)

    # --- four small fields: folded-W1 multi-hot gather (one MXU matmul) -----
    multihot = ((row_sm == g + offsets[0]) | (row_sm == a + offsets[1]) |
                (row_sm == mj + offsets[2]) | (row_sm == gr + offsets[3])
                ).astype(f32)                                          # (16, tb)
    h = jnp.dot(m_small_ref[...], multihot,
                preferred_element_type=f32)                            # (64, tb)

    # --- item field: radix (hi, lo) gather -----------------------------------
    hi = it >> shift                               # id // 32
    lo = it & (lo_width - 1)                       # id %  32
    lo_oh = (row_lo == lo).astype(f32)                                 # (32, tb)
    # gathered[k*E + e, b] = item_table[k*32 + lo_b, e]
    gathered = jnp.dot(t2_ref[...], lo_oh,
                       preferred_element_type=f32)                     # (128, tb)
    emb = jnp.zeros((e_dim, tb), dtype=f32)
    for k in range(n_hi):                          # static unroll, 16 steps
        emb = emb + jnp.where(hi == k,
                              gathered[k * e_dim:(k + 1) * e_dim, :], 0.0)
    h = h + jnp.dot(w1i_ref[...], emb, preferred_element_type=f32)     # (64, tb)

    # --- bias + ReLU + second Linear (sublane reduction, lane-dense out) ----
    h = jnp.maximum(h + b1_ref[...], 0.0)
    o = jnp.sum(h * w2_ref[...], axis=0, keepdims=True) + b2_ref[...]  # (1, tb)
    o_ref[...] = o.astype(o_ref.dtype)


# ------------------------------ model wrapper --------------------------------
class DemographicNetPallas:
    def __init__(self, key, gender_dim=2, age_dim=2, major_dim=6, grade_dim=5,
                 num_items=500, embed_dim=8, hidden_dim=64):
        ks = jax.random.split(key, 9)
        init = lambda k, shape, scale: (scale * jax.random.normal(k, shape)).astype(jnp.float32)
        # Parameters, same parameterization/shapes as the torch module.
        self.gender_embed = init(ks[0], (gender_dim, embed_dim), 1.0)
        self.age_embed    = init(ks[1], (age_dim, embed_dim), 1.0)
        self.major_embed  = init(ks[2], (major_dim, embed_dim), 1.0)
        self.grade_embed  = init(ks[3], (grade_dim, embed_dim), 1.0)
        self.item_embed   = init(ks[4], (num_items, embed_dim), 1.0)
        input_dim = embed_dim * 5
        self.w1 = init(ks[5], (input_dim, hidden_dim), 1.0 / float(input_dim) ** 0.5)
        self.b1 = init(ks[6], (1, hidden_dim), 0.01)
        self.w2 = init(ks[7], (hidden_dim, 1), 1.0 / float(hidden_dim) ** 0.5)
        self.b2 = init(ks[8], (1, 1), 0.01)

        hp = jax.lax.Precision.HIGHEST

        # Fold W1 into the four small tables: M_f = (table_f @ W1_f)^T (64, vocab_f).
        small_tabs = (self.gender_embed, self.age_embed,
                      self.major_embed, self.grade_embed)
        folds, offsets, off = [], [], 0
        for f, tab in enumerate(small_tabs):
            w1_f = self.w1[f * embed_dim:(f + 1) * embed_dim, :]        # (E, H)
            folds.append(jnp.dot(tab, w1_f, precision=hp).T)            # (H, vocab_f)
            offsets.append(off)
            off += tab.shape[0]
        m_small = jnp.concatenate(folds, axis=1)                        # (H, 15)
        n_small = _round_up(m_small.shape[1], 8)                        # 16
        self._m_small = jnp.pad(m_small, ((0, 0), (0, n_small - m_small.shape[1])))
        self._offsets = tuple(offsets)                                  # (0, 2, 4, 10)

        # Item table rearranged for the radix (hi, lo) gather (kept unfolded so
        # the dynamic hi-selection happens in embed space, not hidden space).
        self._lo_width = 32
        n_hi = -(-num_items // self._lo_width)                          # 16
        items_pad = n_hi * self._lo_width                               # 512
        tab = jnp.zeros((items_pad, embed_dim), jnp.float32).at[:num_items].set(self.item_embed)
        # t2[k*E + e, l] = item_table[k*32 + l, e]
        self._t2_item = (tab.reshape(n_hi, self._lo_width, embed_dim)
                            .transpose(0, 2, 1)
                            .reshape(n_hi * embed_dim, self._lo_width))
        self._w1_item_t = jnp.asarray(self.w1[4 * embed_dim:, :].T)     # (H, E)

        self._b1_col = self.b1.reshape(hidden_dim, 1)
        self._w2_col = self.w2.reshape(hidden_dim, 1)
        assert n_small <= self._lo_width

    def __call__(self, gender, age, major, grade, item):
        B = int(gender.shape[0])
        B128 = _round_up(B, 128)
        # Lane-dense batch tile (multiple of 128), large to amortize per-step
        # overhead; keep >= 2 grid steps when possible for v7x's two TCs.
        if B128 >= 256:
            TB = min(1024, max(128, (B128 // 2) // 128 * 128))
        else:
            TB = 128
        B_pad = _round_up(B, TB)

        def prep(ids):
            ids = jnp.asarray(ids, jnp.int32).reshape(-1)
            return jnp.pad(ids, (0, B_pad - B))
        ids = jnp.stack([prep(x) for x in (gender, age, major, grade, item)])  # (5, B_pad)

        consts = [self._m_small, self._t2_item, self._w1_item_t,
                  self._b1_col, self._w2_col, self.b2]
        const_specs = [pl.BlockSpec(c.shape, lambda i: (0, 0)) for c in consts]

        kernel = functools.partial(_demographic_mlp_kernel,
                                   offsets=self._offsets,
                                   lo_width=self._lo_width)
        out = pl.pallas_call(
            kernel,
            out_shape=jax.ShapeDtypeStruct((1, B_pad), jnp.float32),
            grid=(B_pad // TB,),
            in_specs=[pl.BlockSpec((5, TB), lambda i: (0, i))] + const_specs,
            out_specs=pl.BlockSpec((1, TB), lambda i: (0, i)),
            compiler_params=pltpu.CompilerParams(
                dimension_semantics=("parallel",)),
        )(ids, *consts)

        # Matches torch `.squeeze()` (drops all unit dims, incl. the B == 1 case).
        return jnp.squeeze(out[:, :B])


# ----------------------------------- main ------------------------------------
if __name__ == "__main__":
    key = jax.random.PRNGKey(0)
    pkey, dkey = jax.random.split(key)
    model = DemographicNetPallas(pkey)

    B = 8
    dks = jax.random.split(dkey, 5)
    gender = jax.random.randint(dks[0], (B,), 0, 2,   dtype=jnp.int32)
    age    = jax.random.randint(dks[1], (B,), 0, 2,   dtype=jnp.int32)
    major  = jax.random.randint(dks[2], (B,), 0, 6,   dtype=jnp.int32)
    grade  = jax.random.randint(dks[3], (B,), 0, 5,   dtype=jnp.int32)
    item   = jax.random.randint(dks[4], (B,), 0, 500, dtype=jnp.int32)

    out = jax.block_until_ready(model(gender, age, major, grade, item))

    # Pure-JAX reference of the same forward (gather -> concat -> MLP), unfolded.
    hp = jax.lax.Precision.HIGHEST
    x = jnp.concatenate([
        jnp.take(model.gender_embed, gender, axis=0),
        jnp.take(model.age_embed,    age,    axis=0),
        jnp.take(model.major_embed,  major,  axis=0),
        jnp.take(model.grade_embed,  grade,  axis=0),
        jnp.take(model.item_embed,   item,   axis=0)], axis=-1)
    h = jnp.maximum(jnp.dot(x, model.w1, precision=hp) + model.b1, 0.0)
    expected = jnp.squeeze(jnp.dot(h, model.w2, precision=hp) + model.b2)

    assert out.shape == (B,), out.shape
    assert jnp.allclose(out, expected, atol=1e-4, rtol=1e-4), \
        float(jnp.max(jnp.abs(out - expected)))

    print("KERNEL_OK")
</pallas_src>

<mosaic_0001>
module attributes {stable_mosaic.version = 11 : i64} {
  func.func @_demographic_mlp_kernel(%arg0: i32, %arg1: memref<5x128xi32, #tpu.memory_space<vmem>>, %arg2: memref<64x16xf32, #tpu.memory_space<vmem>>, %arg3: memref<128x32xf32, #tpu.memory_space<vmem>>, %arg4: memref<64x8xf32, #tpu.memory_space<vmem>>, %arg5: memref<64x1xf32, #tpu.memory_space<vmem>>, %arg6: memref<64x1xf32, #tpu.memory_space<vmem>>, %arg7: memref<1x1xf32, #tpu.memory_space<vmem>>, %arg8: memref<1x128xf32, #tpu.memory_space<vmem>>) attributes {dimension_semantics = [#tpu.dimension_semantics<parallel>], iteration_bounds = array<i64: 1>, scalar_prefetch = 0 : i64, scratch_operands = 0 : i64, tpu.core_type = #tpu.core_type<tc>, window_params = [{transform_indices = @transform_0, window_bounds = array<i64: 5, 128>}, {pipeline_mode = #tpu.pipeline_mode<synchronous>, transform_indices = @transform_1, window_bounds = array<i64: 64, 16>}, {pipeline_mode = #tpu.pipeline_mode<synchronous>, transform_indices = @transform_2, window_bounds = array<i64: 128, 32>}, {pipeline_mode = #tpu.pipeline_mode<synchronous>, transform_indices = @transform_3, window_bounds = array<i64: 64, 8>}, {pipeline_mode = #tpu.pipeline_mode<synchronous>, transform_indices = @transform_4, window_bounds = array<i64: 64, 1>}, {pipeline_mode = #tpu.pipeline_mode<synchronous>, transform_indices = @transform_5, window_bounds = array<i64: 64, 1>}, {pipeline_mode = #tpu.pipeline_mode<synchronous>, transform_indices = @transform_6, window_bounds = array<i64: 1, 1>}, {transform_indices = @transform_7, window_bounds = array<i64: 1, 128>}]} {
    %c0 = arith.constant 0 : index
    %c0_0 = arith.constant 0 : index
    %0 = vector.load %arg1[%c0, %c0_0] : memref<5x128xi32, #tpu.memory_space<vmem>>, vector<5x128xi32>
    %1 = vector.extract_strided_slice %0 {offsets = [0, 0], sizes = [1, 128], strides = [1, 1]} : vector<5x128xi32> to vector<1x128xi32>
    %2 = vector.extract_strided_slice %0 {offsets = [1, 0], sizes = [1, 128], strides = [1, 1]} : vector<5x128xi32> to vector<1x128xi32>
    %3 = vector.extract_strided_slice %0 {offsets = [2, 0], sizes = [1, 128], strides = [1, 1]} : vector<5x128xi32> to vector<1x128xi32>
    %4 = vector.extract_strided_slice %0 {offsets = [3, 0], sizes = [1, 128], strides = [1, 1]} : vector<5x128xi32> to vector<1x128xi32>
    %5 = vector.extract_strided_slice %0 {offsets = [4, 0], sizes = [1, 128], strides = [1, 1]} : vector<5x128xi32> to vector<1x128xi32>
    %6 = tpu.iota {dimensions = array<i32: 0>} : vector<32x128xi32>
    %7 = vector.extract_strided_slice %6 {offsets = [0, 0], sizes = [16, 128], strides = [1, 1]} : vector<32x128xi32> to vector<16x128xi32>
    %c0_i32 = arith.constant 0 : i32
    %8 = vector.broadcast %c0_i32 : i32 to vector<1x128xi32>
    %9 = arith.addi %1, %8 : vector<1x128xi32>
    %10 = vector.broadcast %9 : vector<1x128xi32> to vector<16x128xi32>
    %11 = arith.cmpi eq, %7, %10 : vector<16x128xi32>
    %c2_i32 = arith.constant 2 : i32
    %12 = vector.broadcast %c2_i32 : i32 to vector<1x128xi32>
    %13 = arith.addi %2, %12 : vector<1x128xi32>
    %14 = vector.broadcast %13 : vector<1x128xi32> to vector<16x128xi32>
    %15 = arith.cmpi eq, %7, %14 : vector<16x128xi32>
    %16 = arith.ori %11, %15 : vector<16x128xi1>
    %c4_i32 = arith.constant 4 : i32
    %17 = vector.broadcast %c4_i32 : i32 to vector<1x128xi32>
    %18 = arith.addi %3, %17 : vector<1x128xi32>
    %19 = vector.broadcast %18 : vector<1x128xi32> to vector<16x128xi32>
    %20 = arith.cmpi eq, %7, %19 : vector<16x128xi32>
    %21 = arith.ori %16, %20 : vector<16x128xi1>
    %c10_i32 = arith.constant 10 : i32
    %22 = vector.broadcast %c10_i32 : i32 to vector<1x128xi32>
    %23 = arith.addi %4, %22 : vector<1x128xi32>
    %24 = vector.broadcast %23 : vector<1x128xi32> to vector<16x128xi32>
    %25 = arith.cmpi eq, %7, %24 : vector<16x128xi32>
    %26 = arith.ori %21, %25 : vector<16x128xi1>
    %27 = arith.extui %26 : vector<16x128xi1> to vector<16x128xi32>
    %28 = arith.sitofp %27 : vector<16x128xi32> to vector<16x128xf32>
    %c0_1 = arith.constant 0 : index
    %c0_2 = arith.constant 0 : index
    %29 = vector.load %arg2[%c0_1, %c0_2] : memref<64x16xf32, #tpu.memory_space<vmem>>, vector<64x16xf32>
    %cst = arith.constant dense<0.000000e+00> : vector<64x128xf32>
    %30 = tpu.matmul %29, %28, %cst {dimension_numbers = #tpu.dot_dimension_numbers<[1], [0], [0], [1], [0, 0, 1, 1], [], []>} : vector<64x16xf32>, vector<16x128xf32>, vector<64x128xf32> -> vector<64x128xf32>
    %c5_i32 = arith.constant 5 : i32
    %31 = vector.broadcast %c5_i32 : i32 to vector<1x128xi32>
    %32 = arith.shrsi %5, %31 : vector<1x128xi32>
    %c31_i32 = arith.constant 31 : i32
    %33 = vector.broadcast %c31_i32 : i32 to vector<1x128xi32>
    %34 = arith.andi %5, %33 : vector<1x128xi32>
    %35 = vector.broadcast %34 : vector<1x128xi32> to vector<32x128xi32>
    %36 = arith.cmpi eq, %6, %35 : vector<32x128xi32>
    %37 = arith.extui %36 : vector<32x128xi1> to vector<32x128xi32>
    %38 = arith.sitofp %37 : vector<32x128xi32> to vector<32x128xf32>
    %c0_3 = arith.constant 0 : index
    %c0_4 = arith.constant 0 : index
    %39 = vector.load %arg3[%c0_3, %c0_4] : memref<128x32xf32, #tpu.memory_space<vmem>>, vector<128x32xf32>
    %cst_5 = arith.constant dense<0.000000e+00> : vector<128x128xf32>
    %40 = tpu.matmul %39, %38, %cst_5 {dimension_numbers = #tpu.dot_dimension_numbers<[1], [0], [0], [1], [0, 0, 1, 1], [], []>} : vector<128x32xf32>, vector<32x128xf32>, vector<128x128xf32> -> vector<128x128xf32>
    %cst_6 = arith.constant 0.000000e+00 : f32
    %41 = vector.broadcast %cst_6 : f32 to vector<8x128xf32>
    %c0_i32_7 = arith.constant 0 : i32
    %42 = vector.broadcast %c0_i32_7 : i32 to vector<1x128xi32>
    %43 = arith.cmpi eq, %32, %42 : vector<1x128xi32>
    %44 = vector.extract_strided_slice %40 {offsets = [0, 0], sizes = [8, 128], strides = [1, 1]} : vector<128x128xf32> to vector<8x128xf32>
    %cst_8 = arith.constant 0.000000e+00 : f32
    %45 = vector.shape_cast %43 : vector<1x128xi1> to vector<1x128xi1>
    %46 = vector.broadcast %45 : vector<1x128xi1> to vector<8x128xi1>
    %47 = vector.broadcast %cst_8 : f32 to vector<8x128xf32>
    %48 = arith.select %46, %44, %47 : vector<8x128xi1>, vector<8x128xf32>
    %49 = arith.addf %41, %48 : vector<8x128xf32>
    %c1_i32 = arith.constant 1 : i32
    %50 = vector.broadcast %c1_i32 : i32 to vector<1x128xi32>
    %51 = arith.cmpi eq, %32, %50 : vector<1x128xi32>
    %52 = vector.extract_strided_slice %40 {offsets = [8, 0], sizes = [8, 128], strides = [1, 1]} : vector<128x128xf32> to vector<8x128xf32>
    %cst_9 = arith.constant 0.000000e+00 : f32
    %53 = vector.shape_cast %51 : vector<1x128xi1> to vector<1x128xi1>
    %54 = vector.broadcast %53 : vector<1x128xi1> to vector<8x128xi1>
    %55 = vector.broadcast %cst_9 : f32 to vector<8x128xf32>
    %56 = arith.select %54, %52, %55 : vector<8x128xi1>, vector<8x128xf32>
    %57 = arith.addf %49, %56 : vector<8x128xf32>
    %c2_i32_10 = arith.constant 2 : i32
    %58 = vector.broadcast %c2_i32_10 : i32 to vector<1x128xi32>
    %59 = arith.cmpi eq, %32, %58 : vector<1x128xi32>
    %60 = vector.extract_strided_slice %40 {offsets = [16, 0], sizes = [8, 128], strides = [1, 1]} : vector<128x128xf32> to vector<8x128xf32>
    %cst_11 = arith.constant 0.000000e+00 : f32
    %61 = vector.shape_cast %59 : vector<1x128xi1> to vector<1x128xi1>
    %62 = vector.broadcast %61 : vector<1x128xi1> to vector<8x128xi1>
    %63 = vector.broadcast %cst_11 : f32 to vector<8x128xf32>
    %64 = arith.select %62, %60, %63 : vector<8x128xi1>, vector<8x128xf32>
    %65 = arith.addf %57, %64 : vector<8x128xf32>
    %c3_i32 = arith.constant 3 : i32
    %66 = vector.broadcast %c3_i32 : i32 to vector<1x128xi32>
    %67 = arith.cmpi eq, %32, %66 : vector<1x128xi32>
    %68 = vector.extract_strided_slice %40 {offsets = [24, 0], sizes = [8, 128], strides = [1, 1]} : vector<128x128xf32> to vector<8x128xf32>
    %cst_12 = arith.constant 0.000000e+00 : f32
    %69 = vector.shape_cast %67 : vector<1x128xi1> to vector<1x128xi1>
    %70 = vector.broadcast %69 : vector<1x128xi1> to vector<8x128xi1>
    %71 = vector.broadcast %cst_12 : f32 to vector<8x128xf32>
    %72 = arith.select %70, %68, %71 : vector<8x128xi1>, vector<8x128xf32>
    %73 = arith.addf %65, %72 : vector<8x128xf32>
    %c4_i32_13 = arith.constant 4 : i32
    %74 = vector.broadcast %c4_i32_13 : i32 to vector<1x128xi32>
    %75 = arith.cmpi eq, %32, %74 : vector<1x128xi32>
    %76 = vector.extract_strided_slice %40 {offsets = [32, 0], sizes = [8, 128], strides = [1, 1]} : vector<128x128xf32> to vector<8x128xf32>
    %cst_14 = arith.constant 0.000000e+00 : f32
    %77 = vector.shape_cast %75 : vector<1x128xi1> to vector<1x128xi1>
    %78 = vector.broadcast %77 : vector<1x128xi1> to vector<8x128xi1>
    %79 = vector.broadcast %cst_14 : f32 to vector<8x128xf32>
    %80 = arith.select %78, %76, %79 : vector<8x128xi1>, vector<8x128xf32>
    %81 = arith.addf %73, %80 : vector<8x128xf32>
    %c5_i32_15 = arith.constant 5 : i32
    %82 = vector.broadcast %c5_i32_15 : i32 to vector<1x128xi32>
    %83 = arith.cmpi eq, %32, %82 : vector<1x128xi32>
    %84 = vector.extract_strided_slice %40 {offsets = [40, 0], sizes = [8, 128], strides = [1, 1]} : vector<128x128xf32> to vector<8x128xf32>
    %cst_16 = arith.constant 0.000000e+00 : f32
    %85 = vector.shape_cast %83 : vector<1x128xi1> to vector<1x128xi1>
    %86 = vector.broadcast %85 : vector<1x128xi1> to vector<8x128xi1>
    %87 = vector.broadcast %cst_16 : f32 to vector<8x128xf32>
    %88 = arith.select %86, %84, %87 : vector<8x128xi1>, vector<8x128xf32>
    %89 = arith.addf %81, %88 : vector<8x128xf32>
    %c6_i32 = arith.constant 6 : i32
    %90 = vector.broadcast %c6_i32 : i32 to vector<1x128xi32>
    %91 = arith.cmpi eq, %32, %90 : vector<1x128xi32>
    %92 = vector.extract_strided_slice %40 {offsets = [48, 0], sizes = [8, 128], strides = [1, 1]} : vector<128x128xf32> to vector<8x128xf32>
    %cst_17 = arith.constant 0.000000e+00 : f32
    %93 = vector.shape_cast %91 : vector<1x128xi1> to vector<1x128xi1>
    %94 = vector.broadcast %93 : vector<1x128xi1> to vector<8x128xi1>
    %95 = vector.broadcast %cst_17 : f32 to vector<8x128xf32>
    %96 = arith.select %94, %92, %95 : vector<8x128xi1>, vector<8x128xf32>
    %97 = arith.addf %89, %96 : vector<8x128xf32>
    %c7_i32 = arith.constant 7 : i32
    %98 = vector.broadcast %c7_i32 : i32 to vector<1x128xi32>
    %99 = arith.cmpi eq, %32, %98 : vector<1x128xi32>
    %100 = vector.extract_strided_slice %40 {offsets = [56, 0], sizes = [8, 128], strides = [1, 1]} : vector<128x128xf32> to vector<8x128xf32>
    %cst_18 = arith.constant 0.000000e+00 : f32
    %101 = vector.shape_cast %99 : vector<1x128xi1> to vector<1x128xi1>
    %102 = vector.broadcast %101 : vector<1x128xi1> to vector<8x128xi1>
    %103 = vector.broadcast %cst_18 : f32 to vector<8x128xf32>
    %104 = arith.select %102, %100, %103 : vector<8x128xi1>, vector<8x128xf32>
    %105 = arith.addf %97, %104 : vector<8x128xf32>
    %c8_i32 = arith.constant 8 : i32
    %106 = vector.broadcast %c8_i32 : i32 to vector<1x128xi32>
    %107 = arith.cmpi eq, %32, %106 : vector<1x128xi32>
    %108 = vector.extract_strided_slice %40 {offsets = [64, 0], sizes = [8, 128], strides = [1, 1]} : vector<128x128xf32> to vector<8x128xf32>
    %cst_19 = arith.constant 0.000000e+00 : f32
    %109 = vector.shape_cast %107 : vector<1x128xi1> to vector<1x128xi1>
    %110 = vector.broadcast %109 : vector<1x128xi1> to vector<8x128xi1>
    %111 = vector.broadcast %cst_19 : f32 to vector<8x128xf32>
    %112 = arith.select %110, %108, %111 : vector<8x128xi1>, vector<8x128xf32>
    %113 = arith.addf %105, %112 : vector<8x128xf32>
    %c9_i32 = arith.constant 9 : i32
    %114 = vector.broadcast %c9_i32 : i32 to vector<1x128xi32>
    %115 = arith.cmpi eq, %32, %114 : vector<1x128xi32>
    %116 = vector.extract_strided_slice %40 {offsets = [72, 0], sizes = [8, 128], strides = [1, 1]} : vector<128x128xf32> to vector<8x128xf32>
    %cst_20 = arith.constant 0.000000e+00 : f32
    %117 = vector.shape_cast %115 : vector<1x128xi1> to vector<1x128xi1>
    %118 = vector.broadcast %117 : vector<1x128xi1> to vector<8x128xi1>
    %119 = vector.broadcast %cst_20 : f32 to vector<8x128xf32>
    %120 = arith.select %118, %116, %119 : vector<8x128xi1>, vector<8x128xf32>
    %121 = arith.addf %113, %120 : vector<8x128xf32>
    %c10_i32_21 = arith.constant 10 : i32
    %122 = vector.broadcast %c10_i32_21 : i32 to vector<1x128xi32>
    %123 = arith.cmpi eq, %32, %122 : vector<1x128xi32>
    %124 = vector.extract_strided_slice %40 {offsets = [80, 0], sizes = [8, 128], strides = [1, 1]} : vector<128x128xf32> to vector<8x128xf32>
    %cst_22 = arith.constant 0.000000e+00 : f32
    %125 = vector.shape_cast %123 : vector<1x128xi1> to vector<1x128xi1>
    %126 = vector.broadcast %125 : vector<1x128xi1> to vector<8x128xi1>
    %127 = vector.broadcast %cst_22 : f32 to vector<8x128xf32>
    %128 = arith.select %126, %124, %127 : vector<8x128xi1>, vector<8x128xf32>
    %129 = arith.addf %121, %128 : vector<8x128xf32>
    %c11_i32 = arith.constant 11 : i32
    %130 = vector.broadcast %c11_i32 : i32 to vector<1x128xi32>
    %131 = arith.cmpi eq, %32, %130 : vector<1x128xi32>
    %132 = vector.extract_strided_slice %40 {offsets = [88, 0], sizes = [8, 128], strides = [1, 1]} : vector<128x128xf32> to vector<8x128xf32>
    %cst_23 = arith.constant 0.000000e+00 : f32
    %133 = vector.shape_cast %131 : vector<1x128xi1> to vector<1x128xi1>
    %134 = vector.broadcast %133 : vector<1x128xi1> to vector<8x128xi1>
    %135 = vector.broadcast %cst_23 : f32 to vector<8x128xf32>
    %136 = arith.select %134, %132, %135 : vector<8x128xi1>, vector<8x128xf32>
    %137 = arith.addf %129, %136 : vector<8x128xf32>
    %c12_i32 = arith.constant 12 : i32
    %138 = vector.broadcast %c12_i32 : i32 to vector<1x128xi32>
    %139 = arith.cmpi eq, %32, %138 : vector<1x128xi32>
    %140 = vector.extract_strided_slice %40 {offsets = [96, 0], sizes = [8, 128], strides = [1, 1]} : vector<128x128xf32> to vector<8x128xf32>
    %cst_24 = arith.constant 0.000000e+00 : f32
    %141 = vector.shape_cast %139 : vector<1x128xi1> to vector<1x128xi1>
    %142 = vector.broadcast %141 : vector<1x128xi1> to vector<8x128xi1>
    %143 = vector.broadcast %cst_24 : f32 to vector<8x128xf32>
    %144 = arith.select %142, %140, %143 : vector<8x128xi1>, vector<8x128xf32>
    %145 = arith.addf %137, %144 : vector<8x128xf32>
    %c13_i32 = arith.constant 13 : i32
    %146 = vector.broadcast %c13_i32 : i32 to vector<1x128xi32>
    %147 = arith.cmpi eq, %32, %146 : vector<1x128xi32>
    %148 = vector.extract_strided_slice %40 {offsets = [104, 0], sizes = [8, 128], strides = [1, 1]} : vector<128x128xf32> to vector<8x128xf32>
    %cst_25 = arith.constant 0.000000e+00 : f32
    %149 = vector.shape_cast %147 : vector<1x128xi1> to vector<1x128xi1>
    %150 = vector.broadcast %149 : vector<1x128xi1> to vector<8x128xi1>
    %151 = vector.broadcast %cst_25 : f32 to vector<8x128xf32>
    %152 = arith.select %150, %148, %151 : vector<8x128xi1>, vector<8x128xf32>
    %153 = arith.addf %145, %152 : vector<8x128xf32>
    %c14_i32 = arith.constant 14 : i32
    %154 = vector.broadcast %c14_i32 : i32 to vector<1x128xi32>
    %155 = arith.cmpi eq, %32, %154 : vector<1x128xi32>
    %156 = vector.extract_strided_slice %40 {offsets = [112, 0], sizes = [8, 128], strides = [1, 1]} : vector<128x128xf32> to vector<8x128xf32>
    %cst_26 = arith.constant 0.000000e+00 : f32
    %157 = vector.shape_cast %155 : vector<1x128xi1> to vector<1x128xi1>
    %158 = vector.broadcast %157 : vector<1x128xi1> to vector<8x128xi1>
    %159 = vector.broadcast %cst_26 : f32 to vector<8x128xf32>
    %160 = arith.select %158, %156, %159 : vector<8x128xi1>, vector<8x128xf32>
    %161 = arith.addf %153, %160 : vector<8x128xf32>
    %c15_i32 = arith.constant 15 : i32
    %162 = vector.broadcast %c15_i32 : i32 to vector<1x128xi32>
    %163 = arith.cmpi eq, %32, %162 : vector<1x128xi32>
    %164 = vector.extract_strided_slice %40 {offsets = [120, 0], sizes = [8, 128], strides = [1, 1]} : vector<128x128xf32> to vector<8x128xf32>
    %cst_27 = arith.constant 0.000000e+00 : f32
    %165 = vector.shape_cast %163 : vector<1x128xi1> to vector<1x128xi1>
    %166 = vector.broadcast %165 : vector<1x128xi1> to vector<8x128xi1>
    %167 = vector.broadcast %cst_27 : f32 to vector<8x128xf32>
    %168 = arith.select %166, %164, %167 : vector<8x128xi1>, vector<8x128xf32>
    %169 = arith.addf %161, %168 : vector<8x128xf32>
    %c0_28 = arith.constant 0 : index
    %c0_29 = arith.constant 0 : index
    %170 = vector.load %arg4[%c0_28, %c0_29] : memref<64x8xf32, #tpu.memory_space<vmem>>, vector<64x8xf32>
    %cst_30 = arith.constant dense<0.000000e+00> : vector<64x128xf32>
    %171 = tpu.matmul %170, %169, %cst_30 {dimension_numbers = #tpu.dot_dimension_numbers<[1], [0], [0], [1], [0, 0, 1, 1], [], []>} : vector<64x8xf32>, vector<8x128xf32>, vector<64x128xf32> -> vector<64x128xf32>
    %172 = arith.addf %30, %171 : vector<64x128xf32>
    %c0_31 = arith.constant 0 : index
    %c0_32 = arith.constant 0 : index
    %173 = vector.load %arg5[%c0_31, %c0_32] : memref<64x1xf32, #tpu.memory_space<vmem>>, vector<64x1xf32>
    %174 = vector.broadcast %173 : vector<64x1xf32> to vector<64x128xf32>
    %175 = arith.addf %172, %174 : vector<64x128xf32>
    %cst_33 = arith.constant 0.000000e+00 : f32
    %176 = vector.broadcast %cst_33 : f32 to vector<64x128xf32>
    %177 = arith.maximumf %175, %176 : vector<64x128xf32>
    %c0_34 = arith.constant 0 : index
    %c0_35 = arith.constant 0 : index
    %178 = vector.load %arg6[%c0_34, %c0_35] : memref<64x1xf32, #tpu.memory_space<vmem>>, vector<64x1xf32>
    %179 = vector.broadcast %178 : vector<64x1xf32> to vector<64x128xf32>
    %180 = arith.mulf %177, %179 : vector<64x128xf32>
    %cst_36 = arith.constant dense<0.000000e+00> : vector<128xf32>
    %181 = vector.multi_reduction <add>, %180, %cst_36 [0] : vector<64x128xf32> to vector<128xf32>
    %182 = vector.shape_cast %181 : vector<128xf32> to vector<1x128xf32>
    %c0_37 = arith.constant 0 : index
    %c0_38 = arith.constant 0 : index
    %183 = vector.load %arg7[%c0_37, %c0_38] : memref<1x1xf32, #tpu.memory_space<vmem>>, vector<1x1xf32>
    %184 = vector.broadcast %183 : vector<1x1xf32> to vector<1x128xf32>
    %185 = arith.addf %182, %184 : vector<1x128xf32>
    %c0_39 = arith.constant 0 : index
    %c0_40 = arith.constant 0 : index
    %186 = vector.load %arg8[%c0_39, %c0_40] : memref<1x128xf32, #tpu.memory_space<vmem>>, vector<1x128xf32>
    tpu.vector_store %arg8[%c0_39, %c0_40], %185 {strides = array<i32>} : memref<1x128xf32, #tpu.memory_space<vmem>>, vector<1x128xf32>,
    return
  }
  func.func @transform_0(%arg0: i32) -> (i32, i32) {
    %c0_i32 = arith.constant 0 : i32
    %c0_i32_0 = arith.constant 0 : i32
    return %c0_i32, %arg0 : i32, i32
  }
  func.func @transform_1(%arg0: i32) -> (i32, i32) {
    %c0_i32 = arith.constant 0 : i32
    %c0_i32_0 = arith.constant 0 : i32
    %c0_i32_1 = arith.constant 0 : i32
    return %c0_i32, %c0_i32_0 : i32, i32
  }
  func.func @transform_2(%arg0: i32) -> (i32, i32) {
    %c0_i32 = arith.constant 0 : i32
    %c0_i32_0 = arith.constant 0 : i32
    %c0_i32_1 = arith.constant 0 : i32
    return %c0_i32, %c0_i32_0 : i32, i32
  }
  func.func @transform_3(%arg0: i32) -> (i32, i32) {
    %c0_i32 = arith.constant 0 : i32
    %c0_i32_0 = arith.constant 0 : i32
    %c0_i32_1 = arith.constant 0 : i32
    return %c0_i32, %c0_i32_0 : i32, i32
  }
  func.func @transform_4(%arg0: i32) -> (i32, i32) {
    %c0_i32 = arith.constant 0 : i32
    %c0_i32_0 = arith.constant 0 : i32
    %c0_i32_1 = arith.constant 0 : i32
    return %c0_i32, %c0_i32_0 : i32, i32
  }
  func.func @transform_5(%arg0: i32) -> (i32, i32) {
    %c0_i32 = arith.constant 0 : i32
    %c0_i32_0 = arith.constant 0 : i32
    %c0_i32_1 = arith.constant 0 : i32
    return %c0_i32, %c0_i32_0 : i32, i32
  }
  func.func @transform_6(%arg0: i32) -> (i32, i32) {
    %c0_i32 = arith.constant 0 : i32
    %c0_i32_0 = arith.constant 0 : i32
    %c0_i32_1 = arith.constant 0 : i32
    return %c0_i32, %c0_i32_0 : i32, i32
  }
  func.func @transform_7(%arg0: i32) -> (i32, i32) {
    %c0_i32 = arith.constant 0 : i32
    %c0_i32_0 = arith.constant 0 : i32
    return %c0_i32, %arg0 : i32, i32
  }
}

</mosaic_0001>

<llo_original>
// kernel: tpu_custom_call.1
$region0: #{tpu_custom_call.1}
  #allocation0 [shape = 'u32[]', space=smem, size = 0x4, offset = 0x4, fixed_abs, tag = 'smem constant byte address 0x4 - core index']
  #allocation1 [shape = 'u32[144,128]{1,0:T(1,128)}', space=vmem, size = 0x12000, scoped, tag = 'internal scratch']
  #allocation2 [shape = 'f32[1,1]{1,0:T(1,128)S(1)}', space=vmem, size = 0x200, scoped, tag = 'scoped memory for tpu_custom_call.1']
  %s0 = inlined_call_operand.vmem [shape: s32[5,128], index: 0, kind: input, shape index: {}]
  %s1 = inlined_call_operand.vmem [shape: f32[64,16], index: 1, kind: input, shape index: {}]
  %s2 = inlined_call_operand.vmem [shape: f32[128,32], index: 2, kind: input, shape index: {}]
  %s3 = inlined_call_operand.vmem [shape: f32[64,8], index: 3, kind: input, shape index: {}]
  %s4 = inlined_call_operand.vmem [shape: f32[64,1], index: 4, kind: input, shape index: {}]
  %s5 = inlined_call_operand.vmem [shape: f32[64,1], index: 5, kind: input, shape index: {}]
  %s6 = inlined_call_operand.<no memory space> [shape: f32[1,1], index: 6, kind: input, shape index: {}]
  %s7 = inlined_call_operand.hbm [shape: f32[1,128], index: 7, kind: output, shape index: {}]
  %s8 = sld [smem:[#allocation0]]
  $region38: #{tpu_custom_call.1} parent=0
    _
  %s10 = ssub.s32 1, %s8
  %s11 = scalar_select 0, %s10, %s8
  %v12 = vstv %s6
  %13 = vst [vmem:[#allocation2] sm:$0x1] %v12
  $region1: #{tpu_custom_call.1} parent=0
    #allocation3 [shape = 'u8[512]{0}', space=vmem, size = 0x400, scoped, tag = 'output window, operand 0, single buffered']
    #allocation4 [shape = 's32[1]{0}', space=sflag, size = 0x4, scoped, tag = 'scoped memory for tpu_custom_call.1']
    %14 = vsyncpa [#allocation4], 0
    // Predicated region
    $region2: #{tpu_custom_call.1} parent=1 // pred_check
      _
    $region3: #{tpu_custom_call.1} parent=1 // pred_check_branch
      %16 = sbr.rel (0) target = $region5
    $region4: #{tpu_custom_call.1} parent=1 // pred_region
      _
    $region5: #{tpu_custom_call.1} parent=1 // pred_fallthru
      _
    // Predicated region
    $region6: #{tpu_custom_call.1} parent=1 // pred_check
      _
    $region7: #{tpu_custom_call.1} parent=1 // pred_check_branch
      %18 = sbr.rel (0) target = $region9
    $region8: #{tpu_custom_call.1} parent=1 // pred_region
      _
    $region9: #{tpu_custom_call.1} parent=1 // pred_fallthru
      _
    // Predicated region
    $region10: #{tpu_custom_call.1} parent=1 // pred_check
      _
    $region11: #{tpu_custom_call.1} parent=1 // pred_check_branch
      %20 = sbr.rel (0) target = $region13
    $region12: #{tpu_custom_call.1} parent=1 // pred_region
      _
    $region13: #{tpu_custom_call.1} parent=1 // pred_fallthru
      _
    // Predicated region
    $region14: #{tpu_custom_call.1} parent=1 // pred_check
      _
    $region15: #{tpu_custom_call.1} parent=1 // pred_check_branch
      %22 = sbr.rel (0) target = $region17
    $region16: #{tpu_custom_call.1} parent=1 // pred_region
      _
    $region17: #{tpu_custom_call.1} parent=1 // pred_fallthru
      _
    // Predicated region
    $region18: #{tpu_custom_call.1} parent=1 // pred_check
      _
    $region19: #{tpu_custom_call.1} parent=1 // pred_check_branch
      %24 = sbr.rel (0) target = $region21
    $region20: #{tpu_custom_call.1} parent=1 // pred_region
      _
    $region21: #{tpu_custom_call.1} parent=1 // pred_fallthru
      _
    // Predicated region
    $region22: #{tpu_custom_call.1} parent=1 // pred_check
      _
    $region23: #{tpu_custom_call.1} parent=1 // pred_check_branch
      %26 = sbr.rel (0) target = $region25
    $region24: #{tpu_custom_call.1} parent=1 // pred_region
      _
    $region25: #{tpu_custom_call.1} parent=1 // pred_fallthru
      _
    // Predicated region
    $region26: #{tpu_custom_call.1} parent=1 // pred_check
      _
    $region27: #{tpu_custom_call.1} parent=1 // pred_check_branch
      %28 = sbr.rel (0) target = $region29
    $region28: #{tpu_custom_call.1} parent=1 // pred_region
      _
    $region29: #{tpu_custom_call.1} parent=1 // pred_fallthru
      _
    %v29 = vld [vmem:[%s0] sm:$0x1f]
    %v30 = vlaneseq
    %v31 = vshrl.u32 %v30, 7
    %v32 = vadd.s32 %v31, 8
    %v33 = vadd.s32 %v31, 16
    %v34 = vadd.s32 %v31, 24
    %v35 = vlaneseq
    %v36 = vshrl.u32 %v35, 7
    %v37 = vsub.s32 0, %v36
    %v38 = vrot.slane %v29, %v37
    %vm39 = vcmp.eq.s32.totalorder %v31, %v38
    %vm40 = vcmp.eq.s32.totalorder %v32, %v38
    %v41 = vadd.s32 %v29, 2
    %v42 = vlaneseq
    %v43 = vshrl.u32 %v42, 7
    %v44 = vsub.s32 1, %v43
    %v45 = vrot.slane %v41, %v44
    %vm46 = vcmp.eq.s32.totalorder %v31, %v45
    %vm47 = vcmp.eq.s32.totalorder %v32, %v45
    %vm48 = vmor %vm39, %vm46
    %vm49 = vmor %vm40, %vm47
    %v50 = vadd.s32 %v29, 4
    %v51 = vlaneseq
    %v52 = vshrl.u32 %v51, 7
    %v53 = vsub.s32 2, %v52
    %v54 = vrot.slane %v50, %v53
    %vm55 = vcmp.eq.s32.totalorder %v31, %v54
    %vm56 = vcmp.eq.s32.totalorder %v32, %v54
    %vm57 = vmor %vm48, %vm55
    %vm58 = vmor %vm49, %vm56
    %v59 = vadd.s32 %v29, 10
    %v60 = vlaneseq
    %v61 = vshrl.u32 %v60, 7
    %v62 = vsub.s32 3, %v61
    %v63 = vrot.slane %v59, %v62
    %vm64 = vcmp.eq.s32.totalorder %v31, %v63
    %vm65 = vcmp.eq.s32.totalorder %v32, %v63
    %vm66 = vmor %vm57, %vm64
    %vm67 = vmor %vm58, %vm65
    %v68 = vsel %vm66, 1, 0
    %v69 = vsel %vm67, 1, 0
    %v70 = vcvt.s32.f32 %v68
    %v71 = vcvt.s32.f32 %v69
    %v72 = vld [vmem:[%s1] sm:$0xff]
    %v73 = vld [vmem:[%s1 + $0x8] sm:$0xff]
    %v74 = vld [vmem:[%s1 + $0x10] sm:$0xff]
    %v75 = vld [vmem:[%s1 + $0x18] sm:$0xff]
    %v76 = vld [vmem:[%s1 + $0x20] sm:$0xff]
    %v77 = vld [vmem:[%s1 + $0x28] sm:$0xff]
    %v78 = vld [vmem:[%s1 + $0x30] sm:$0xff]
    %v79 = vld [vmem:[%s1 + $0x38] sm:$0xff]
    %v80 = vshra.s32 %v29, 5
    %v81 = vand.u32 %v29, 31
    %v82 = vlaneseq
    %v83 = vshrl.u32 %v82, 7
    %v84 = vsub.s32 4, %v83
    %v85 = vrot.slane %v81, %v84
    %vm86 = vcmp.eq.s32.totalorder %v31, %v85
    %vm87 = vcmp.eq.s32.totalorder %v32, %v85
    %vm88 = vcmp.eq.s32.totalorder %v33, %v85
    %vm89 = vcmp.eq.s32.totalorder %v34, %v85
    %v90 = vsel %vm86, 1, 0
    %v91 = vsel %vm87, 1, 0
    %v92 = vsel %vm88, 1, 0
    %v93 = vsel %vm89, 1, 0
    %v94 = vcvt.s32.f32 %v90
    %v95 = vcvt.s32.f32 %v91
    %v96 = vcvt.s32.f32 %v92
    %v97 = vcvt.s32.f32 %v93
    %v98 = vld [vmem:[%s2] sm:$0xff]
    %v99 = vld [vmem:[%s2 + $0x8] sm:$0xff]
    %v100 = vld [vmem:[%s2 + $0x10] sm:$0xff]
    %v101 = vld [vmem:[%s2 + $0x18] sm:$0xff]
    %v102 = vld [vmem:[%s2 + $0x20] sm:$0xff]
    %v103 = vld [vmem:[%s2 + $0x28] sm:$0xff]
    %v104 = vld [vmem:[%s2 + $0x30] sm:$0xff]
    %v105 = vld [vmem:[%s2 + $0x38] sm:$0xff]
    %v106 = vld [vmem:[%s2 + $0x40] sm:$0xff]
    %v107 = vld [vmem:[%s2 + $0x48] sm:$0xff]
    %v108 = vld [vmem:[%s2 + $0x50] sm:$0xff]
    %v109 = vld [vmem:[%s2 + $0x58] sm:$0xff]
    %v110 = vld [vmem:[%s2 + $0x60] sm:$0xff]
    %v111 = vld [vmem:[%s2 + $0x68] sm:$0xff]
    %v112 = vld [vmem:[%s2 + $0x70] sm:$0xff]
    %v113 = vld [vmem:[%s2 + $0x78] sm:$0xff]
    %vm114 = vcmask 261120
    %v116 = vsel %vm114, %v98, 0
    %v119 = vsel %vm114, %v99, 0
    %v122 = vsel %vm114, %v100, 0
    %v125 = vsel %vm114, %v101, 0
    %v128 = vsel %vm114, %v102, 0
    %v131 = vsel %vm114, %v103, 0
    %v134 = vsel %vm114, %v104, 0
    %v137 = vsel %vm114, %v105, 0
    %v140 = vsel %vm114, %v106, 0
    %v143 = vsel %vm114, %v107, 0
    %v146 = vsel %vm114, %v108, 0
    %v149 = vsel %vm114, %v109, 0
    %v152 = vsel %vm114, %v110, 0
    %v155 = vsel %vm114, %v111, 0
    %v158 = vsel %vm114, %v112, 0
    %v161 = vsel %vm114, %v113, 0
    %163 = vmatprep.subr.mxu0 0.0
    %164 = vmatpush1.msra.mxu0 %v94
    %165 = vmatprep.subr.mxu0 0.0
    %166 = vmatpush1.msra.mxu0 %v95
    %167 = vmatprep.subr.mxu0 0.0
    %168 = vmatpush1.msra.mxu0 %v96
    %169 = vmatprep.subr.mxu0 0.0
    %170 = vmatpush1.msra.mxu0 %v97
    %171 = vmatprep.subr.mxu0 0.0
    %172 = vmatpush1.msra.mxu0 0.0
    %173 = vmatprep.subr.mxu0 0.0
    %174 = vmatpush1.msra.mxu0 0.0
    %175 = vmatprep.subr.mxu0 0.0
    %176 = vmatpush1.msra.mxu0 0.0
    %177 = vmatprep.subr.mxu0 0.0
    %178 = vmatpush1.msra.mxu0 0.0
    %179 = vmatprep.subr.mxu0 0.0
    %180 = vmatpush1.msra.mxu0 0.0
    %181 = vmatprep.subr.mxu0 0.0
    %182 = vmatpush1.msra.mxu0 0.0
    %183 = vmatprep.subr.mxu0 0.0
    %184 = vmatpush1.msra.mxu0 0.0
    %185 = vmatprep.subr.mxu0 0.0
    %186 = vmatpush1.msra.mxu0 0.0
    %187 = vmatprep.subr.mxu0 0.0
    %188 = vmatpush1.msra.mxu0 0.0
    %189 = vmatprep.subr.mxu0 0.0
    %190 = vmatpush1.msra.mxu0 0.0
    %191 = vmatprep.subr.mxu0 0.0
    %192 = vmatpush1.msra.mxu0 0.0
    %193 = vmatprep.subr.mxu0 0.0
    %194 = vmatpush1.msra.mxu0 0.0
    %195 = vmatprep.subr.mxu0 0.0
    %196 = vmatpush1.msra.mxu0 0.0
    %197 = vmatprep.subr.mxu0 0.0
    %198 = vmatpush1.msra.mxu0 0.0
    %199 = vmatprep.subr.mxu0 0.0
    %200 = vmatpush1.msra.mxu0 0.0
    %201 = vmatprep.subr.mxu0 0.0
    %202 = vmatpush1.msra.mxu0 0.0
    %203 = vmatprep.subr.mxu0 0.0
    %204 = vmatpush1.msra.mxu0 0.0
    %205 = vmatprep.subr.mxu0 0.0
    %206 = vmatpush1.msra.mxu0 0.0
    %207 = vmatprep.subr.mxu0 0.0
    %208 = vmatpush1.msra.mxu0 0.0
    %209 = vmatprep.subr.mxu0 0.0
    %210 = vmatpush1.msra.mxu0 0.0
    %211 = vmatprep.subr.mxu0 0.0
    %212 = vmatpush1.msra.mxu0 0.0
    %213 = vmatprep.subr.mxu0 0.0
    %214 = vmatpush1.msra.mxu0 0.0
    %215 = vmatprep.subr.mxu0 0.0
    %216 = vmatpush1.msra.mxu0 0.0
    %217 = vmatprep.subr.mxu0 0.0
    %218 = vmatpush1.msra.mxu0 0.0
    %219 = vmatprep.subr.mxu0 0.0
    %220 = vmatpush1.msra.mxu0 0.0
    %221 = vmatprep.subr.mxu0 0.0
    %222 = vmatpush1.msra.mxu0 0.0
    %223 = vmatprep.subr.mxu0 0.0
    %224 = vmatpush1.msra.mxu0 0.0
    %225 = vmatprep.subr.mxu0 0.0
    %226 = vmatpush1.msra.mxu0 0.0
    %227 = vmatprep.mubr.f32.mxu0 0.0
    %228 = vmatmul.mubr.f32.gmra.mrb[0].mxu0 %v116
    %v229 = vpop.f32.mrb[0].mxu0
    %v230 = vadd.f32 0.0, %v229
    %v231 = vpop.f32.mrb[0].mxu0
    %232 = vmatprep.mubr.f32.mxu0 0.0
    %233 = vmatmul.mubr.f32.gmra.mrb[0].mxu0 %v119
    %v234 = vpop.f32.mrb[0].mxu0
    %v235 = vadd.f32 0.0, %v234
    %v236 = vpop.f32.mrb[0].mxu0
    %237 = vmatprep.mubr.f32.mxu0 0.0
    %238 = vmatmul.mubr.f32.gmra.mrb[0].mxu0 %v122
    %v239 = vpop.f32.mrb[0].mxu0
    %v240 = vadd.f32 0.0, %v239
    %v241 = vpop.f32.mrb[0].mxu0
    %242 = vmatprep.mubr.f32.mxu0 0.0
    %243 = vmatmul.mubr.f32.gmra.mrb[0].mxu0 %v125
    %v244 = vpop.f32.mrb[0].mxu0
    %v245 = vadd.f32 0.0, %v244
    %v246 = vpop.f32.mrb[0].mxu0
    %247 = vmatprep.mubr.f32.mxu0 0.0
    %248 = vmatmul.mubr.f32.gmra.mrb[0].mxu0 %v128
    %v249 = vpop.f32.mrb[0].mxu0
    %v250 = vadd.f32 0.0, %v249
    %v251 = vpop.f32.mrb[0].mxu0
    %252 = vmatprep.mubr.f32.mxu0 0.0
    %253 = vmatmul.mubr.f32.gmra.mrb[0].mxu0 %v131
    %v254 = vpop.f32.mrb[0].mxu0
    %v255 = vadd.f32 0.0, %v254
    %v256 = vpop.f32.mrb[0].mxu0
    %257 = vmatprep.mubr.f32.mxu0 0.0
    %258 = vmatmul.mubr.f32.gmra.mrb[0].mxu0 %v134
    %v259 = vpop.f32.mrb[0].mxu0
    %v260 = vadd.f32 0.0, %v259
    %v261 = vpop.f32.mrb[0].mxu0
    %262 = vmatprep.mubr.f32.mxu0 0.0
    %263 = vmatmul.mubr.f32.gmra.mrb[0].mxu0 %v137
    %v264 = vpop.f32.mrb[0].mxu0
    %v265 = vadd.f32 0.0, %v264
    %v266 = vpop.f32.mrb[0].mxu0
    %267 = vmatprep.mubr.f32.mxu0 0.0
    %268 = vmatmul.mubr.f32.gmra.mrb[0].mxu0 %v140
    %v269 = vpop.f32.mrb[0].mxu0
    %v270 = vadd.f32 0.0, %v269
    %v271 = vpop.f32.mrb[0].mxu0
    %272 = vmatprep.mubr.f32.mxu0 0.0
    %273 = vmatmul.mubr.f32.gmra.mrb[0].mxu0 %v143
    %v274 = vpop.f32.mrb[0].mxu0
    %v275 = vadd.f32 0.0, %v274
    %v276 = vpop.f32.mrb[0].mxu0
    %277 = vmatprep.mubr.f32.mxu0 0.0
    %278 = vmatmul.mubr.f32.gmra.mrb[0].mxu0 %v146
    %v279 = vpop.f32.mrb[0].mxu0
    %v280 = vadd.f32 0.0, %v279
    %v281 = vpop.f32.mrb[0].mxu0
    %282 = vmatprep.mubr.f32.mxu0 0.0
    %283 = vmatmul.mubr.f32.gmra.mrb[0].mxu0 %v149
    %v284 = vpop.f32.mrb[0].mxu0
    %v285 = vadd.f32 0.0, %v284
    %v286 = vpop.f32.mrb[0].mxu0
    %287 = vmatprep.mubr.f32.mxu0 0.0
    %288 = vmatmul.mubr.f32.gmra.mrb[0].mxu0 %v152
    %v289 = vpop.f32.mrb[0].mxu0
    %v290 = vadd.f32 0.0, %v289
    %v291 = vpop.f32.mrb[0].mxu0
    %292 = vmatprep.mubr.f32.mxu0 0.0
    %293 = vmatmul.mubr.f32.gmra.mrb[0].mxu0 %v155
    %v294 = vpop.f32.mrb[0].mxu0
    %v295 = vadd.f32 0.0, %v294
    %v296 = vpop.f32.mrb[0].mxu0
    %297 = vmatprep.mubr.f32.mxu0 0.0
    %298 = vmatmul.mubr.f32.gmra.mrb[0].mxu0 %v158
    %v299 = vpop.f32.mrb[0].mxu0
    %v300 = vadd.f32 0.0, %v299
    %v301 = vpop.f32.mrb[0].mxu0
    %302 = vmatprep.mubr.f32.mxu0 0.0
    %303 = vmatmul.mubr.f32.gmra.mrb[0].mxu0 %v161
    %v304 = vpop.f32.mrb[0].mxu0
    %v305 = vadd.f32 0.0, %v304
    %v306 = vpop.f32.mrb[0].mxu0
    %307 = vdwg.mxu0
    %vm308 = vcmp.eq.s32.totalorder %v80, 0
    %v309 = vsel %vm308, 1, 0
    %v310 = vlaneseq
    %v311 = vshrl.u32 %v310, 7
    %v312 = vsub.s32 4, %v311
    %v313 = vrot.slane %v309, %v312
    %vm314 = vcmp.eq.s32.totalorder %v313, 1
    %v315 = vsel %vm314, %v230, 0.0
    %v316 = vadd.f32 %v315, 0.0
    %vm317 = vcmp.eq.s32.totalorder %v80, 1
    %v318 = vsel %vm317, 1, 0
    %v319 = vlaneseq
    %v320 = vshrl.u32 %v319, 7
    %v321 = vsub.s32 4, %v320
    %v322 = vrot.slane %v318, %v321
    %vm323 = vcmp.eq.s32.totalorder %v322, 1
    %v324 = vsel %vm323, %v235, 0.0
    %v325 = vadd.f32 %v316, %v324
    %vm326 = vcmp.eq.s32.totalorder %v80, 2
    %v327 = vsel %vm326, 1, 0
    %v328 = vlaneseq
    %v329 = vshrl.u32 %v328, 7
    %v330 = vsub.s32 4, %v329
    %v331 = vrot.slane %v327, %v330
    %vm332 = vcmp.eq.s32.totalorder %v331, 1
    %v333 = vsel %vm332, %v240, 0.0
    %v334 = vadd.f32 %v325, %v333
    %vm335 = vcmp.eq.s32.totalorder %v80, 3
    %v336 = vsel %vm335, 1, 0
    %v337 = vlaneseq
    %v338 = vshrl.u32 %v337, 7
    %v339 = vsub.s32 4, %v338
    %v340 = vrot.slane %v336, %v339
    %vm341 = vcmp.eq.s32.totalorder %v340, 1
    %v342 = vsel %vm341, %v245, 0.0
    %v343 = vadd.f32 %v334, %v342
    %vm344 = vcmp.eq.s32.totalorder %v80, 4
    %v345 = vsel %vm344, 1, 0
    %v346 = vlaneseq
    %v347 = vshrl.u32 %v346, 7
    %v348 = vsub.s32 4, %v347
    %v349 = vrot.slane %v345, %v348
    %vm350 = vcmp.eq.s32.totalorder %v349, 1
    %v351 = vsel %vm350, %v250, 0.0
    %v352 = vadd.f32 %v343, %v351
    %vm353 = vcmp.eq.s32.totalorder %v80, 5
    %v354 = vsel %vm353, 1, 0
    %v355 = vlaneseq
    %v356 = vshrl.u32 %v355, 7
    %v357 = vsub.s32 4, %v356
    %v358 = vrot.slane %v354, %v357
    %vm359 = vcmp.eq.s32.totalorder %v358, 1
    %v360 = vsel %vm359, %v255, 0.0
    %v361 = vadd.f32 %v352, %v360
    %vm362 = vcmp.eq.s32.totalorder %v80, 6
    %v363 = vsel %vm362, 1, 0
    %v364 = vlaneseq
    %v365 = vshrl.u32 %v364, 7
    %v366 = vsub.s32 4, %v365
    %v367 = vrot.slane %v363, %v366
    %vm368 = vcmp.eq.s32.totalorder %v367, 1
    %v369 = vsel %vm368, %v260, 0.0
    %v370 = vadd.f32 %v361, %v369
    %vm371 = vcmp.eq.s32.totalorder %v80, 7
    %v372 = vsel %vm371, 1, 0
    %v373 = vlaneseq
    %v374 = vshrl.u32 %v373, 7
    %v375 = vsub.s32 4, %v374
    %v376 = vrot.slane %v372, %v375
    %vm377 = vcmp.eq.s32.totalorder %v376, 1
    %v378 = vsel %vm377, %v265, 0.0
    %v379 = vadd.f32 %v370, %v378
    %vm380 = vcmp.eq.s32.totalorder %v80, 8
    %v381 = vsel %vm380, 1, 0
    %v382 = vlaneseq
    %v383 = vshrl.u32 %v382, 7
    %v384 = vsub.s32 4, %v383
    %v385 = vrot.slane %v381, %v384
    %vm386 = vcmp.eq.s32.totalorder %v385, 1
    %v387 = vsel %vm386, %v270, 0.0
    %v388 = vadd.f32 %v379, %v387
    %vm389 = vcmp.eq.s32.totalorder %v80, 9
    %v390 = vsel %vm389, 1, 0
    %v391 = vlaneseq
    %v392 = vshrl.u32 %v391, 7
    %v393 = vsub.s32 4, %v392
    %v394 = vrot.slane %v390, %v393
    %vm395 = vcmp.eq.s32.totalorder %v394, 1
    %v396 = vsel %vm395, %v275, 0.0
    %v397 = vadd.f32 %v388, %v396
    %vm398 = vcmp.eq.s32.totalorder %v80, 10
    %v399 = vsel %vm398, 1, 0
    %v400 = vlaneseq
    %v401 = vshrl.u32 %v400, 7
    %v402 = vsub.s32 4, %v401
    %v403 = vrot.slane %v399, %v402
    %vm404 = vcmp.eq.s32.totalorder %v403, 1
    %v405 = vsel %vm404, %v280, 0.0
    %v406 = vadd.f32 %v397, %v405
    %vm407 = vcmp.eq.s32.totalorder %v80, 11
    %v408 = vsel %vm407, 1, 0
    %v409 = vlaneseq
    %v410 = vshrl.u32 %v409, 7
    %v411 = vsub.s32 4, %v410
    %v412 = vrot.slane %v408, %v411
    %vm413 = vcmp.eq.s32.totalorder %v412, 1
    %v414 = vsel %vm413, %v285, 0.0
    %v415 = vadd.f32 %v406, %v414
    %vm416 = vcmp.eq.s32.totalorder %v80, 12
    %v417 = vsel %vm416, 1, 0
    %v418 = vlaneseq
    %v419 = vshrl.u32 %v418, 7
    %v420 = vsub.s32 4, %v419
    %v421 = vrot.slane %v417, %v420
    %vm422 = vcmp.eq.s32.totalorder %v421, 1
    %v423 = vsel %vm422, %v290, 0.0
    %v424 = vadd.f32 %v415, %v423
    %vm425 = vcmp.eq.s32.totalorder %v80, 13
    %v426 = vsel %vm425, 1, 0
    %v427 = vlaneseq
    %v428 = vshrl.u32 %v427, 7
    %v429 = vsub.s32 4, %v428
    %v430 = vrot.slane %v426, %v429
    %vm431 = vcmp.eq.s32.totalorder %v430, 1
    %v432 = vsel %vm431, %v295, 0.0
    %v433 = vadd.f32 %v424, %v432
    %vm434 = vcmp.eq.s32.totalorder %v80, 14
    %v435 = vsel %vm434, 1, 0
    %v436 = vlaneseq
    %v437 = vshrl.u32 %v436, 7
    %v438 = vsub.s32 4, %v437
    %v439 = vrot.slane %v435, %v438
    %vm440 = vcmp.eq.s32.totalorder %v439, 1
    %v441 = vsel %vm440, %v300, 0.0
    %v442 = vadd.f32 %v433, %v441
    %vm443 = vcmp.eq.s32.totalorder %v80, 15
    %v444 = vsel %vm443, 1, 0
    %v445 = vlaneseq
    %v446 = vshrl.u32 %v445, 7
    %v447 = vsub.s32 4, %v446
    %v448 = vrot.slane %v444, %v447
    %vm449 = vcmp.eq.s32.totalorder %v448, 1
    %v450 = vsel %vm449, %v305, 0.0
    %v451 = vadd.f32 %v442, %v450
    %v452 = vld [vmem:[%s3] sm:$0xff]
    %v453 = vld [vmem:[%s3 + $0x8] sm:$0xff]
    %v454 = vld [vmem:[%s3 + $0x10] sm:$0xff]
    %v455 = vld [vmem:[%s3 + $0x18] sm:$0xff]
    %v456 = vld [vmem:[%s3 + $0x20] sm:$0xff]
    %v457 = vld [vmem:[%s3 + $0x28] sm:$0xff]
    %v458 = vld [vmem:[%s3 + $0x30] sm:$0xff]
    %v459 = vld [vmem:[%s3 + $0x38] sm:$0xff]
    %vm460 = vcmask 64512
    %v462 = vsel %vm460, %v452, 0
    %v465 = vsel %vm460, %v453, 0
    %v468 = vsel %vm460, %v454, 0
    %v471 = vsel %vm460, %v455, 0
    %v474 = vsel %vm460, %v456, 0
    %v477 = vsel %vm460, %v457, 0
    %v480 = vsel %vm460, %v458, 0
    %v483 = vsel %vm460, %v459, 0
    %485 = vmatprep.subr.mxu0 0.0
    %486 = vmatpush1.msra.mxu0 %v451
    %487 = vmatprep.subr.mxu0 0.0
    %488 = vmatpush1.msra.mxu0 0.0
    %489 = vmatprep.subr.mxu0 0.0
    %490 = vmatpush1.msra.mxu0 0.0
    %491 = vmatprep.subr.mxu0 0.0
    %492 = vmatpush1.msra.mxu0 0.0
    %493 = vmatprep.subr.mxu0 0.0
    %494 = vmatpush1.msra.mxu0 0.0
    %495 = vmatprep.subr.mxu0 0.0
    %496 = vmatpush1.msra.mxu0 0.0
    %497 = vmatprep.subr.mxu0 0.0
    %498 = vmatpush1.msra.mxu0 0.0
    %499 = vmatprep.subr.mxu0 0.0
    %500 = vmatpush1.msra.mxu0 0.0
    %501 = vmatprep.subr.mxu0 0.0
    %502 = vmatpush1.msra.mxu0 0.0
    %503 = vmatprep.subr.mxu0 0.0
    %504 = vmatpush1.msra.mxu0 0.0
    %505 = vmatprep.subr.mxu0 0.0
    %506 = vmatpush1.msra.mxu0 0.0
    %507 = vmatprep.subr.mxu0 0.0
    %508 = vmatpush1.msra.mxu0 0.0
    %509 = vmatprep.subr.mxu0 0.0
    %510 = vmatpush1.msra.mxu0 0.0
    %511 = vmatprep.subr.mxu0 0.0
    %512 = vmatpush1.msra.mxu0 0.0
    %513 = vmatprep.subr.mxu0 0.0
    %514 = vmatpush1.msra.mxu0 0.0
    %515 = vmatprep.subr.mxu0 0.0
    %516 = vmatpush1.msra.mxu0 0.0
    %517 = vmatprep.subr.mxu0 0.0
    %518 = vmatpush1.msra.mxu0 0.0
    %519 = vmatprep.subr.mxu0 0.0
    %520 = vmatpush1.msra.mxu0 0.0
    %521 = vmatprep.subr.mxu0 0.0
    %522 = vmatpush1.msra.mxu0 0.0
    %523 = vmatprep.subr.mxu0 0.0
    %524 = vmatpush1.msra.mxu0 0.0
    %525 = vmatprep.subr.mxu0 0.0
    %526 = vmatpush1.msra.mxu0 0.0
    %527 = vmatprep.subr.mxu0 0.0
    %528 = vmatpush1.msra.mxu0 0.0
    %529 = vmatprep.subr.mxu0 0.0
    %530 = vmatpush1.msra.mxu0 0.0
    %531 = vmatprep.subr.mxu0 0.0
    %532 = vmatpush1.msra.mxu0 0.0
    %533 = vmatprep.subr.mxu0 0.0
    %534 = vmatpush1.msra.mxu0 0.0
    %535 = vmatprep.subr.mxu0 0.0
    %536 = vmatpush1.msra.mxu0 0.0
    %537 = vmatprep.subr.mxu0 0.0
    %538 = vmatpush1.msra.mxu0 0.0
    %539 = vmatprep.subr.mxu0 0.0
    %540 = vmatpush1.msra.mxu0 0.0
    %541 = vmatprep.subr.mxu0 0.0
    %542 = vmatpush1.msra.mxu0 0.0
    %543 = vmatprep.subr.mxu0 0.0
    %544 = vmatpush1.msra.mxu0 0.0
    %545 = vmatprep.subr.mxu0 0.0
    %546 = vmatpush1.msra.mxu0 0.0
    %547 = vmatprep.subr.mxu0 0.0
    %548 = vmatpush1.msra.mxu0 0.0
    %549 = vmatprep.mubr.f32.mxu0 0.0
    %550 = vmatmul.mubr.f32.gmra.mrb[0].mxu0 %v462
    %v551 = vpop.f32.mrb[0].mxu0
    %v552 = vadd.f32 0.0, %v551
    %v553 = vpop.f32.mrb[0].mxu0
    %554 = vmatprep.mubr.f32.mxu0 0.0
    %555 = vmatmul.mubr.f32.gmra.mrb[0].mxu0 %v465
    %v556 = vpop.f32.mrb[0].mxu0
    %v557 = vadd.f32 0.0, %v556
    %v558 = vpop.f32.mrb[0].mxu0
    %559 = vmatprep.mubr.f32.mxu0 0.0
    %560 = vmatmul.mubr.f32.gmra.mrb[0].mxu0 %v468
    %v561 = vpop.f32.mrb[0].mxu0
    %v562 = vadd.f32 0.0, %v561
    %v563 = vpop.f32.mrb[0].mxu0
    %564 = vmatprep.mubr.f32.mxu0 0.0
    %565 = vmatmul.mubr.f32.gmra.mrb[0].mxu0 %v471
    %v566 = vpop.f32.mrb[0].mxu0
    %v567 = vadd.f32 0.0, %v566
    %v568 = vpop.f32.mrb[0].mxu0
    %569 = vmatprep.mubr.f32.mxu0 0.0
    %570 = vmatmul.mubr.f32.gmra.mrb[0].mxu0 %v474
    %v571 = vpop.f32.mrb[0].mxu0
    %v572 = vadd.f32 0.0, %v571
    %v573 = vpop.f32.mrb[0].mxu0
    %574 = vmatprep.mubr.f32.mxu0 0.0
    %575 = vmatmul.mubr.f32.gmra.mrb[0].mxu0 %v477
    %v576 = vpop.f32.mrb[0].mxu0
    %v577 = vadd.f32 0.0, %v576
    %v578 = vpop.f32.mrb[0].mxu0
    %579 = vmatprep.mubr.f32.mxu0 0.0
    %580 = vmatmul.mubr.f32.gmra.mrb[0].mxu0 %v480
    %v581 = vpop.f32.mrb[0].mxu0
    %v582 = vadd.f32 0.0, %v581
    %v583 = vpop.f32.mrb[0].mxu0
    %584 = vmatprep.mubr.f32.mxu0 0.0
    %585 = vmatmul.mubr.f32.gmra.mrb[0].mxu0 %v483
    %v586 = vpop.f32.mrb[0].mxu0
    %v587 = vadd.f32 0.0, %v586
    %v588 = vpop.f32.mrb[0].mxu0
    %589 = vdwg.mxu0
    %vm590 = vcmask 130048
    %v592 = vsel %vm590, %v72, 0
    %v595 = vsel %vm590, %v73, 0
    %v598 = vsel %vm590, %v74, 0
    %v601 = vsel %vm590, %v75, 0
    %v604 = vsel %vm590, %v76, 0
    %v607 = vsel %vm590, %v77, 0
    %v610 = vsel %vm590, %v78, 0
    %v613 = vsel %vm590, %v79, 0
    %615 = vmatprep.subr.mxu0 0.0
    %616 = vmatpush1.msra.mxu0 %v70
    %617 = vmatprep.subr.mxu0 0.0
    %618 = vmatpush1.msra.mxu0 %v71
    %619 = vmatprep.subr.mxu0 0.0
    %620 = vmatpush1.msra.mxu0 0.0
    %621 = vmatprep.subr.mxu0 0.0
    %622 = vmatpush1.msra.mxu0 0.0
    %623 = vmatprep.subr.mxu0 0.0
    %624 = vmatpush1.msra.mxu0 0.0
    %625 = vmatprep.subr.mxu0 0.0
    %626 = vmatpush1.msra.mxu0 0.0
    %627 = vmatprep.subr.mxu0 0.0
    %628 = vmatpush1.msra.mxu0 0.0
    %629 = vmatprep.subr.mxu0 0.0
    %630 = vmatpush1.msra.mxu0 0.0
    %631 = vmatprep.subr.mxu0 0.0
    %632 = vmatpush1.msra.mxu0 0.0
    %633 = vmatprep.subr.mxu0 0.0
    %634 = vmatpush1.msra.mxu0 0.0
    %635 = vmatprep.subr.mxu0 0.0
    %636 = vmatpush1.msra.mxu0 0.0
    %637 = vmatprep.subr.mxu0 0.0
    %638 = vmatpush1.msra.mxu0 0.0
    %639 = vmatprep.subr.mxu0 0.0
    %640 = vmatpush1.msra.mxu0 0.0
    %641 = vmatprep.subr.mxu0 0.0
    %642 = vmatpush1.msra.mxu0 0.0
    %643 = vmatprep.subr.mxu0 0.0
    %644 = vmatpush1.msra.mxu0 0.0
    %645 = vmatprep.subr.mxu0 0.0
    %646 = vmatpush1.msra.mxu0 0.0
    %647 = vmatprep.subr.mxu0 0.0
    %648 = vmatpush1.msra.mxu0 0.0
    %649 = vmatprep.subr.mxu0 0.0
    %650 = vmatpush1.msra.mxu0 0.0
    %651 = vmatprep.subr.mxu0 0.0
    %652 = vmatpush1.msra.mxu0 0.0
    %653 = vmatprep.subr.mxu0 0.0
    %654 = vmatpush1.msra.mxu0 0.0
    %655 = vmatprep.subr.mxu0 0.0
    %656 = vmatpush1.msra.mxu0 0.0
    %657 = vmatprep.subr.mxu0 0.0
    %658 = vmatpush1.msra.mxu0 0.0
    %659 = vmatprep.subr.mxu0 0.0
    %660 = vmatpush1.msra.mxu0 0.0
    %661 = vmatprep.subr.mxu0 0.0
    %662 = vmatpush1.msra.mxu0 0.0
    %663 = vmatprep.subr.mxu0 0.0
    %664 = vmatpush1.msra.mxu0 0.0
    %665 = vmatprep.subr.mxu0 0.0
    %666 = vmatpush1.msra.mxu0 0.0
    %667 = vmatprep.subr.mxu0 0.0
    %668 = vmatpush1.msra.mxu0 0.0
    %669 = vmatprep.subr.mxu0 0.0
    %670 = vmatpush1.msra.mxu0 0.0
    %671 = vmatprep.subr.mxu0 0.0
    %672 = vmatpush1.msra.mxu0 0.0
    %673 = vmatprep.subr.mxu0 0.0
    %674 = vmatpush1.msra.mxu0 0.0
    %675 = vmatprep.subr.mxu0 0.0
    %676 = vmatpush1.msra.mxu0 0.0
    %677 = vmatprep.subr.mxu0 0.0
    %678 = vmatpush1.msra.mxu0 0.0
    %679 = vmatprep.mubr.f32.mxu0 0.0
    %680 = vmatmul.mubr.f32.gmra.mrb[0].mxu0 %v592
    %v681 = vpop.f32.mrb[0].mxu0
    %v682 = vadd.f32 %v552, %v681
    %v683 = vpop.f32.mrb[0].mxu0
    %684 = vmatprep.mubr.f32.mxu0 0.0
    %685 = vmatmul.mubr.f32.gmra.mrb[0].mxu0 %v595
    %v686 = vpop.f32.mrb[0].mxu0
    %v687 = vadd.f32 %v557, %v686
    %v688 = vpop.f32.mrb[0].mxu0
    %689 = vmatprep.mubr.f32.mxu0 0.0
    %690 = vmatmul.mubr.f32.gmra.mrb[0].mxu0 %v598
    %v691 = vpop.f32.mrb[0].mxu0
    %v692 = vadd.f32 %v562, %v691
    %v693 = vpop.f32.mrb[0].mxu0
    %694 = vmatprep.mubr.f32.mxu0 0.0
    %695 = vmatmul.mubr.f32.gmra.mrb[0].mxu0 %v601
    %v696 = vpop.f32.mrb[0].mxu0
    %v697 = vadd.f32 %v567, %v696
    %v698 = vpop.f32.mrb[0].mxu0
    %699 = vmatprep.mubr.f32.mxu0 0.0
    %700 = vmatmul.mubr.f32.gmra.mrb[0].mxu0 %v604
    %v701 = vpop.f32.mrb[0].mxu0
    %v702 = vadd.f32 %v572, %v701
    %v703 = vpop.f32.mrb[0].mxu0
    %704 = vmatprep.mubr.f32.mxu0 0.0
    %705 = vmatmul.mubr.f32.gmra.mrb[0].mxu0 %v607
    %v706 = vpop.f32.mrb[0].mxu0
    %v707 = vadd.f32 %v577, %v706
    %v708 = vpop.f32.mrb[0].mxu0
    %709 = vmatprep.mubr.f32.mxu0 0.0
    %710 = vmatmul.mubr.f32.gmra.mrb[0].mxu0 %v610
    %v711 = vpop.f32.mrb[0].mxu0
    %v712 = vadd.f32 %v582, %v711
    %v713 = vpop.f32.mrb[0].mxu0
    %714 = vmatprep.mubr.f32.mxu0 0.0
    %715 = vmatmul.mubr.f32.gmra.mrb[0].mxu0 %v613
    %v716 = vpop.f32.mrb[0].mxu0
    %v717 = vadd.f32 %v587, %v716
    %v718 = vpop.f32.mrb[0].mxu0
    %719 = vdwg.mxu0
    %v720 = vld [vmem:[%s4] sm:$0xff]
    %v721 = vld [vmem:[%s4 + $0x8] sm:$0xff]
    %v722 = vld [vmem:[%s4 + $0x10] sm:$0xff]
    %v723 = vld [vmem:[%s4 + $0x18] sm:$0xff]
    %v724 = vld [vmem:[%s4 + $0x20] sm:$0xff]
    %v725 = vld [vmem:[%s4 + $0x28] sm:$0xff]
    %v726 = vld [vmem:[%s4 + $0x30] sm:$0xff]
    %v727 = vld [vmem:[%s4 + $0x38] sm:$0xff]
    %729 = vset.pattern.permute.xlu0 0
    %730 = vperm.xlu0 %729, %v720
    %v731 = vpop.permute.xlu0 %730
    %734 = vset.pattern.permute.xlu0 0
    %735 = vperm.xlu0 %734, %v721
    %v736 = vpop.permute.xlu0 %735
    %739 = vset.pattern.permute.xlu0 0
    %740 = vperm.xlu0 %739, %v722
    %v741 = vpop.permute.xlu0 %740
    %744 = vset.pattern.permute.xlu0 0
    %745 = vperm.xlu0 %744, %v723
    %v746 = vpop.permute.xlu0 %745
    %749 = vset.pattern.permute.xlu0 0
    %750 = vperm.xlu0 %749, %v724
    %v751 = vpop.permute.xlu0 %750
    %754 = vset.pattern.permute.xlu0 0
    %755 = vperm.xlu0 %754, %v725
    %v756 = vpop.permute.xlu0 %755
    %759 = vset.pattern.permute.xlu0 0
    %760 = vperm.xlu0 %759, %v726
    %v761 = vpop.permute.xlu0 %760
    %764 = vset.pattern.permute.xlu0 0
    %765 = vperm.xlu0 %764, %v727
    %v766 = vpop.permute.xlu0 %765
    %v768 = vadd.f32 %v682, %v731
    %v769 = vadd.f32 %v687, %v736
    %v770 = vadd.f32 %v692, %v741
    %v771 = vadd.f32 %v697, %v746
    %v772 = vadd.f32 %v702, %v751
    %v773 = vadd.f32 %v707, %v756
    %v774 = vadd.f32 %v712, %v761
    %v775 = vadd.f32 %v717, %v766
    %v776 = vmax.f32 %v768, 0.0
    %v777 = vmax.f32 %v769, 0.0
    %v778 = vmax.f32 %v770, 0.0
    %v779 = vmax.f32 %v771, 0.0
    %v780 = vmax.f32 %v772, 0.0
    %v781 = vmax.f32 %v773, 0.0
    %v782 = vmax.f32 %v774, 0.0
    %v783 = vmax.f32 %v775, 0.0
    %v784 = vld [vmem:[%s5] sm:$0xff]
    %v785 = vld [vmem:[%s5 + $0x8] sm:$0xff]
    %v786 = vld [vmem:[%s5 + $0x10] sm:$0xff]
    %v787 = vld [vmem:[%s5 + $0x18] sm:$0xff]
    %v788 = vld [vmem:[%s5 + $0x20] sm:$0xff]
    %v789 = vld [vmem:[%s5 + $0x28] sm:$0xff]
    %v790 = vld [vmem:[%s5 + $0x30] sm:$0xff]
    %v791 = vld [vmem:[%s5 + $0x38] sm:$0xff]
    %793 = vset.pattern.permute.xlu0 0
    %794 = vperm.xlu0 %793, %v784
    %v795 = vpop.permute.xlu0 %794
    %798 = vset.pattern.permute.xlu0 0
    %799 = vperm.xlu0 %798, %v785
    %v800 = vpop.permute.xlu0 %799
    %803 = vset.pattern.permute.xlu0 0
    %804 = vperm.xlu0 %803, %v786
    %v805 = vpop.permute.xlu0 %804
    %808 = vset.pattern.permute.xlu0 0
    %809 = vperm.xlu0 %808, %v787
    %v810 = vpop.permute.xlu0 %809
    %813 = vset.pattern.permute.xlu0 0
    %814 = vperm.xlu0 %813, %v788
    %v815 = vpop.permute.xlu0 %814
    %818 = vset.pattern.permute.xlu0 0
    %819 = vperm.xlu0 %818, %v789
    %v820 = vpop.permute.xlu0 %819
    %823 = vset.pattern.permute.xlu0 0
    %824 = vperm.xlu0 %823, %v790
    %v825 = vpop.permute.xlu0 %824
    %828 = vset.pattern.permute.xlu0 0
    %829 = vperm.xlu0 %828, %v791
    %v830 = vpop.permute.xlu0 %829
    %v832 = vmul.f32 %v776, %v795
    %v833 = vmul.f32 %v777, %v800
    %v834 = vmul.f32 %v778, %v805
    %v835 = vmul.f32 %v779, %v810
    %v836 = vmul.f32 %v780, %v815
    %v837 = vmul.f32 %v781, %v820
    %v838 = vmul.f32 %v782, %v825
    %v839 = vmul.f32 %v783, %v830
    %v840 = vadd.f32 %v832, %v833
    %v841 = vadd.f32 %v840, %v834
    %v842 = vadd.f32 %v841, %v835
    %v843 = vadd.f32 %v842, %v836
    %v844 = vadd.f32 %v843, %v837
    %v845 = vadd.f32 %v844, %v838
    %v846 = vadd.f32 %v845, %v839
    %v847 = vrot.slane %v846, 4
    %v848 = vadd.f32 %v846, %v847
    %v849 = vrot.slane %v848, 2
    %v850 = vadd.f32 %v848, %v849
    %v851 = vrot.slane %v850, 1
    %v852 = vadd.f32 %v850, %v851
    %v853 = vld [vmem:[#allocation2] sm:$0x1]
    %855 = vset.pattern.permute.xlu0 0
    %856 = vperm.xlu0 %855, %v853
    %v857 = vpop.permute.xlu0 %856
    %v859 = vlaneseq
    %v860 = vshrl.u32 %v859, 7
    %v861 = vsub.s32 0, %v860
    %v862 = vrot.slane %v857, %v861
    %v863 = vadd.f32 %v852, %v862
    %864 = vst [vmem:[#allocation3] sm:$0x1] %v863
    // Predicated region
    $region30: #{tpu_custom_call.1} parent=1 // pred_check
      _
    $region31: #{tpu_custom_call.1} parent=1 // pred_check_branch
      %866 = sbr.rel (0) target = $region33
    $region32: #{tpu_custom_call.1} parent=1 // pred_region
      %s868 = ssub.s32 16, 16
      %869 = vsyncadd [#allocation4], %s868
      %s871 = sshll.u32 [#allocation3], 4
      %s872 = int_to_ptr.vmem [resolvable:$true] %s871
      %874 = dma.vmem_to_hbm [thread:$0]  %s872, 16, %s7, [#allocation4]
    $region33: #{tpu_custom_call.1} parent=1 // pred_fallthru
      _
    // Predicated region
    $region34: #{tpu_custom_call.1} parent=1 // pred_check
      _
    $region35: #{tpu_custom_call.1} parent=1 // pred_check_branch
      %876 = sbr.rel (0) target = $region37
    $region36: #{tpu_custom_call.1} parent=1 // pred_region
      %877 = dma.done [#allocation4], 16
    $region37: #{tpu_custom_call.1} parent=1 // pred_fallthru
      _
    %878 = vsyncpa [#allocation4], 1

</llo_original>
